<compile_context>
chip_gen: v6e
topology: v6e:2x2x1
jax: 0.10.0
libtpu: 0.0.40
codegen_flags: <defaults>
</compile_context>

<pallas_src>
import jax
import jax.numpy as jnp
from jax import lax
from jax.experimental import pallas as pl
from jax.experimental.pallas import tpu as pltpu

EPS = 1e-5
H1 = 128          # hidden 1
H2 = 256          # hidden 2
OUT_PAD = 128     # lane-padded output width


def dqn_kernel(x_ref, w1_ref, w2_ref, w3_ref, p128_ref, p256_ref, o_ref):
    """x_ref: (B, S) f32. w*: bf16. p128: (4,128) f32 rows=[b1,g1,be1,b3pad].
    p256: (3,256) f32 rows=[b2,g2,be2]. o_ref: (B, 128) f32."""
    x = x_ref[...]                                   # (B, S) f32
    inv_b = jnp.float32(1.0 / x.shape[0])

    p128 = p128_ref[...]
    p256 = p256_ref[...]
    b1, g1, be1, b3 = (p128[0:1, :], p128[1:2, :], p128[2:3, :], p128[3:4, :])
    b2, g2, be2 = (p256[0:1, :], p256[1:2, :], p256[2:3, :])

    # ---- Linear(S, 128): bf16 operands, f32 accumulation on the MXU ----
    h = jnp.dot(x.astype(jnp.bfloat16), w1_ref[...],
                preferred_element_type=jnp.float32) + b1          # (B, 128)

    # ---- BatchNorm1d(128), training-mode batch stats, folded scale/shift ----
    mean = jnp.sum(h, axis=0, keepdims=True) * inv_b
    msq = jnp.sum(h * h, axis=0, keepdims=True) * inv_b
    var = msq - mean * mean                                       # biased var
    scale = g1 * lax.rsqrt(var + EPS)
    shift = be1 - mean * scale
    h = h * scale + shift

    # ---- Linear(128, 256) ----
    h = jnp.dot(h.astype(jnp.bfloat16), w2_ref[...],
                preferred_element_type=jnp.float32) + b2          # (B, 256)

    # ---- BatchNorm1d(256) ----
    mean = jnp.sum(h, axis=0, keepdims=True) * inv_b
    msq = jnp.sum(h * h, axis=0, keepdims=True) * inv_b
    var = msq - mean * mean
    scale = g2 * lax.rsqrt(var + EPS)
    shift = be2 - mean * scale
    h = h * scale + shift

    # ---- Linear(256, action_length) padded to 128 lanes (lane-dense store) ----
    o_ref[...] = jnp.dot(h.astype(jnp.bfloat16), w3_ref[...],
                         preferred_element_type=jnp.float32) + b3


def prepare_params(p):
    """Pack / pad raw f32 params into the kernel's argument layout."""
    A = p["w3"].shape[1]
    w3_pad = jnp.zeros((H2, OUT_PAD), jnp.float32).at[:, :A].set(p["w3"])
    b3_pad = jnp.zeros((1, OUT_PAD), jnp.float32).at[:, :A].set(p["b3"])
    p128 = jnp.concatenate([p["b1"], p["g1"], p["be1"], b3_pad], axis=0)  # (4,128)
    p256 = jnp.concatenate([p["b2"], p["g2"], p["be2"]], axis=0)          # (3,256)
    return dict(
        w1=p["w1"].astype(jnp.bfloat16),
        w2=p["w2"].astype(jnp.bfloat16),
        w3=w3_pad.astype(jnp.bfloat16),
        p128=p128.astype(jnp.float32),
        p256=p256.astype(jnp.float32),
        action_length=A,
    )


def dqn_forward(x, packed):
    """x: (B, S) float32.  packed: output of prepare_params."""
    B = x.shape[0]
    A = packed["action_length"]
    vmem = pl.BlockSpec(memory_space=pltpu.MemorySpace.VMEM)
    out = pl.pallas_call(
        dqn_kernel,
        out_shape=jax.ShapeDtypeStruct((B, OUT_PAD), jnp.float32),
        in_specs=[vmem] * 6,
        out_specs=vmem,
    )(x, packed["w1"], packed["w2"], packed["w3"], packed["p128"], packed["p256"])
    return out[:, :A]


def init_params(key, state_length, action_length):
    """Deterministic synthetic init (shapes match the PyTorch module)."""
    ks = jax.random.split(key, 6)

    def lin(k, fan_in, fan_out):
        bound = 1.0 / jnp.sqrt(fan_in)
        kw, kb = jax.random.split(k)
        w = jax.random.uniform(kw, (fan_in, fan_out), jnp.float32, -bound, bound)
        b = jax.random.uniform(kb, (1, fan_out), jnp.float32, -bound, bound)
        return w, b

    w1, b1 = lin(ks[0], state_length, H1)
    w2, b2 = lin(ks[1], H1, H2)
    w3, b3 = lin(ks[2], H2, action_length)
    # BatchNorm affine params (PyTorch default: gamma=1, beta=0); perturb a bit
    # so the scale/shift path is genuinely exercised.
    g1 = 1.0 + 0.01 * jax.random.normal(ks[3], (1, H1), jnp.float32)
    be1 = 0.01 * jax.random.normal(ks[4], (1, H1), jnp.float32)
    g2 = jnp.ones((1, H2), jnp.float32)
    be2 = jnp.zeros((1, H2), jnp.float32)
    return dict(w1=w1, b1=b1, g1=g1, be1=be1,
                w2=w2, b2=b2, g2=g2, be2=be2,
                w3=w3, b3=b3)


def reference_forward(x, p):
    """Plain-JAX reference mirroring the kernel math (bf16 matmul operands,
    f32 accumulation, training-mode BN with folded scale/shift)."""
    bf16 = jnp.bfloat16

    def bn(h, g, be):
        mean = jnp.mean(h, axis=0, keepdims=True)
        var = jnp.mean(h * h, axis=0, keepdims=True) - mean * mean
        scale = g * lax.rsqrt(var + EPS)
        return h * scale + (be - mean * scale)

    h = jnp.dot(x.astype(bf16), p["w1"].astype(bf16),
                preferred_element_type=jnp.float32) + p["b1"]
    h = bn(h, p["g1"], p["be1"])
    h = jnp.dot(h.astype(bf16), p["w2"].astype(bf16),
                preferred_element_type=jnp.float32) + p["b2"]
    h = bn(h, p["g2"], p["be2"])
    return jnp.dot(h.astype(bf16), p["w3"].astype(bf16),
                   preferred_element_type=jnp.float32) + p["b3"]


if __name__ == "__main__":
    # DQN(number_of_index=1, state_length=<ignored>, action_length=3)
    #   -> state_length is forced to 8 inside __init__.
    state_length = 8
    action_length = 3
    batch = 8

    key = jax.random.PRNGKey(0)
    kx, kp = jax.random.split(key)
    x = jax.random.normal(kx, (batch, state_length), jnp.float32)
    params = init_params(kp, state_length, action_length)
    packed = prepare_params(params)

    out = dqn_forward(x, packed)
    out = jax.block_until_ready(out)

    ref = reference_forward(x, params)
    assert out.shape == (batch, action_length)
    assert jnp.allclose(out, ref, atol=2e-3, rtol=2e-3), "mismatch vs reference"

    print("KERNEL_OK")
</pallas_src>

<mosaic_0001>
module attributes {stable_mosaic.version = 11 : i64} {
  func.func @dqn_kernel(%arg0: memref<8x8xf32, #tpu.memory_space<vmem>>, %arg1: memref<8x128xbf16, #tpu.memory_space<vmem>>, %arg2: memref<128x256xbf16, #tpu.memory_space<vmem>>, %arg3: memref<256x128xbf16, #tpu.memory_space<vmem>>, %arg4: memref<4x128xf32, #tpu.memory_space<vmem>>, %arg5: memref<3x256xf32, #tpu.memory_space<vmem>>, %arg6: memref<8x128xf32, #tpu.memory_space<vmem>>) attributes {dimension_semantics = [], scalar_prefetch = 0 : i64, scratch_operands = 0 : i64, tpu.core_type = #tpu.core_type<tc>} {
    %c0 = arith.constant 0 : index
    %c0_0 = arith.constant 0 : index
    %0 = vector.load %arg0[%c0, %c0_0] : memref<8x8xf32, #tpu.memory_space<vmem>>, vector<8x8xf32>
    %c0_1 = arith.constant 0 : index
    %c0_2 = arith.constant 0 : index
    %1 = vector.load %arg4[%c0_1, %c0_2] : memref<4x128xf32, #tpu.memory_space<vmem>>, vector<4x128xf32>
    %c0_3 = arith.constant 0 : index
    %c0_4 = arith.constant 0 : index
    %2 = vector.load %arg5[%c0_3, %c0_4] : memref<3x256xf32, #tpu.memory_space<vmem>>, vector<3x256xf32>
    %3 = vector.extract_strided_slice %1 {offsets = [0, 0], sizes = [1, 128], strides = [1, 1]} : vector<4x128xf32> to vector<1x128xf32>
    %4 = vector.extract_strided_slice %1 {offsets = [1, 0], sizes = [1, 128], strides = [1, 1]} : vector<4x128xf32> to vector<1x128xf32>
    %5 = vector.extract_strided_slice %1 {offsets = [2, 0], sizes = [1, 128], strides = [1, 1]} : vector<4x128xf32> to vector<1x128xf32>
    %6 = vector.extract_strided_slice %1 {offsets = [3, 0], sizes = [1, 128], strides = [1, 1]} : vector<4x128xf32> to vector<1x128xf32>
    %7 = vector.extract_strided_slice %2 {offsets = [0, 0], sizes = [1, 256], strides = [1, 1]} : vector<3x256xf32> to vector<1x256xf32>
    %8 = vector.extract_strided_slice %2 {offsets = [1, 0], sizes = [1, 256], strides = [1, 1]} : vector<3x256xf32> to vector<1x256xf32>
    %9 = vector.extract_strided_slice %2 {offsets = [2, 0], sizes = [1, 256], strides = [1, 1]} : vector<3x256xf32> to vector<1x256xf32>
    %10 = arith.truncf %0 : vector<8x8xf32> to vector<8x8xbf16>
    %c0_5 = arith.constant 0 : index
    %c0_6 = arith.constant 0 : index
    %11 = vector.load %arg1[%c0_5, %c0_6] : memref<8x128xbf16, #tpu.memory_space<vmem>>, vector<8x128xbf16>
    %cst = arith.constant dense<0.000000e+00> : vector<8x128xf32>
    %12 = tpu.matmul %10, %11, %cst {dimension_numbers = #tpu.dot_dimension_numbers<[1], [0], [0], [1], [0, 0, 1, 1], [], []>} : vector<8x8xbf16>, vector<8x128xbf16>, vector<8x128xf32> -> vector<8x128xf32>
    %13 = vector.broadcast %3 : vector<1x128xf32> to vector<8x128xf32>
    %14 = arith.addf %12, %13 : vector<8x128xf32>
    %cst_7 = arith.constant dense<0.000000e+00> : vector<128xf32>
    %15 = vector.multi_reduction <add>, %14, %cst_7 [0] : vector<8x128xf32> to vector<128xf32>
    %16 = vector.shape_cast %15 : vector<128xf32> to vector<1x128xf32>
    %cst_8 = arith.constant 1.250000e-01 : f32
    %17 = vector.broadcast %cst_8 : f32 to vector<1x128xf32>
    %18 = arith.mulf %16, %17 : vector<1x128xf32>
    %19 = arith.mulf %14, %14 : vector<8x128xf32>
    %cst_9 = arith.constant dense<0.000000e+00> : vector<128xf32>
    %20 = vector.multi_reduction <add>, %19, %cst_9 [0] : vector<8x128xf32> to vector<128xf32>
    %21 = vector.shape_cast %20 : vector<128xf32> to vector<1x128xf32>
    %cst_10 = arith.constant 1.250000e-01 : f32
    %22 = vector.broadcast %cst_10 : f32 to vector<1x128xf32>
    %23 = arith.mulf %21, %22 : vector<1x128xf32>
    %24 = arith.mulf %18, %18 : vector<1x128xf32>
    %25 = arith.subf %23, %24 : vector<1x128xf32>
    %cst_11 = arith.constant 9.99999974E-6 : f32
    %26 = vector.broadcast %cst_11 : f32 to vector<1x128xf32>
    %27 = arith.addf %25, %26 : vector<1x128xf32>
    %28 = math.rsqrt %27 : vector<1x128xf32>
    %29 = arith.mulf %4, %28 : vector<1x128xf32>
    %30 = arith.mulf %18, %29 : vector<1x128xf32>
    %31 = arith.subf %5, %30 : vector<1x128xf32>
    %32 = vector.broadcast %29 : vector<1x128xf32> to vector<8x128xf32>
    %33 = arith.mulf %14, %32 : vector<8x128xf32>
    %34 = vector.broadcast %31 : vector<1x128xf32> to vector<8x128xf32>
    %35 = arith.addf %33, %34 : vector<8x128xf32>
    %36 = arith.truncf %35 : vector<8x128xf32> to vector<8x128xbf16>
    %c0_12 = arith.constant 0 : index
    %c0_13 = arith.constant 0 : index
    %37 = vector.load %arg2[%c0_12, %c0_13] : memref<128x256xbf16, #tpu.memory_space<vmem>>, vector<128x256xbf16>
    %cst_14 = arith.constant dense<0.000000e+00> : vector<8x256xf32>
    %38 = tpu.matmul %36, %37, %cst_14 {dimension_numbers = #tpu.dot_dimension_numbers<[1], [0], [0], [1], [0, 0, 1, 1], [], []>} : vector<8x128xbf16>, vector<128x256xbf16>, vector<8x256xf32> -> vector<8x256xf32>
    %39 = vector.broadcast %7 : vector<1x256xf32> to vector<8x256xf32>
    %40 = arith.addf %38, %39 : vector<8x256xf32>
    %cst_15 = arith.constant dense<0.000000e+00> : vector<256xf32>
    %41 = vector.multi_reduction <add>, %40, %cst_15 [0] : vector<8x256xf32> to vector<256xf32>
    %42 = vector.shape_cast %41 : vector<256xf32> to vector<1x256xf32>
    %cst_16 = arith.constant 1.250000e-01 : f32
    %43 = vector.broadcast %cst_16 : f32 to vector<1x256xf32>
    %44 = arith.mulf %42, %43 : vector<1x256xf32>
    %45 = arith.mulf %40, %40 : vector<8x256xf32>
    %cst_17 = arith.constant dense<0.000000e+00> : vector<256xf32>
    %46 = vector.multi_reduction <add>, %45, %cst_17 [0] : vector<8x256xf32> to vector<256xf32>
    %47 = vector.shape_cast %46 : vector<256xf32> to vector<1x256xf32>
    %cst_18 = arith.constant 1.250000e-01 : f32
    %48 = vector.broadcast %cst_18 : f32 to vector<1x256xf32>
    %49 = arith.mulf %47, %48 : vector<1x256xf32>
    %50 = arith.mulf %44, %44 : vector<1x256xf32>
    %51 = arith.subf %49, %50 : vector<1x256xf32>
    %cst_19 = arith.constant 9.99999974E-6 : f32
    %52 = vector.broadcast %cst_19 : f32 to vector<1x256xf32>
    %53 = arith.addf %51, %52 : vector<1x256xf32>
    %54 = math.rsqrt %53 : vector<1x256xf32>
    %55 = arith.mulf %8, %54 : vector<1x256xf32>
    %56 = arith.mulf %44, %55 : vector<1x256xf32>
    %57 = arith.subf %9, %56 : vector<1x256xf32>
    %58 = vector.broadcast %55 : vector<1x256xf32> to vector<8x256xf32>
    %59 = arith.mulf %40, %58 : vector<8x256xf32>
    %60 = vector.broadcast %57 : vector<1x256xf32> to vector<8x256xf32>
    %61 = arith.addf %59, %60 : vector<8x256xf32>
    %62 = arith.truncf %61 : vector<8x256xf32> to vector<8x256xbf16>
    %c0_20 = arith.constant 0 : index
    %c0_21 = arith.constant 0 : index
    %63 = vector.load %arg3[%c0_20, %c0_21] : memref<256x128xbf16, #tpu.memory_space<vmem>>, vector<256x128xbf16>
    %cst_22 = arith.constant dense<0.000000e+00> : vector<8x128xf32>
    %64 = tpu.matmul %62, %63, %cst_22 {dimension_numbers = #tpu.dot_dimension_numbers<[1], [0], [0], [1], [0, 0, 1, 1], [], []>} : vector<8x256xbf16>, vector<256x128xbf16>, vector<8x128xf32> -> vector<8x128xf32>
    %65 = vector.broadcast %6 : vector<1x128xf32> to vector<8x128xf32>
    %66 = arith.addf %64, %65 : vector<8x128xf32>
    %c0_23 = arith.constant 0 : index
    %c0_24 = arith.constant 0 : index
    %67 = vector.load %arg6[%c0_23, %c0_24] : memref<8x128xf32, #tpu.memory_space<vmem>>, vector<8x128xf32>
    tpu.vector_store %arg6[%c0_23, %c0_24], %66 {strides = array<i32>} : memref<8x128xf32, #tpu.memory_space<vmem>>, vector<8x128xf32>,
    return
  }
}

</mosaic_0001>

<llo_original>
// kernel: tpu_custom_call.1
$region0: #{tpu_custom_call.1}
  #allocation0 [shape = 'u32[]', space=smem, size = 0x4, offset = 0x4, fixed_abs, tag = 'smem constant byte address 0x4 - core index']
  #allocation1 [shape = 'u32[144,128]{1,0:T(1,128)}', space=vmem, size = 0x12000, scoped, tag = 'internal scratch']
  %s0 = inlined_call_operand.hbm [shape: f32[8,8], index: 0, kind: input, shape index: {}]
  %s1 = inlined_call_operand.hbm [shape: bf16[8,128], index: 1, kind: input, shape index: {}]
  %s2 = inlined_call_operand.hbm [shape: bf16[128,256], index: 2, kind: input, shape index: {}]
  %s3 = inlined_call_operand.hbm [shape: bf16[256,128], index: 3, kind: input, shape index: {}]
  %s4 = inlined_call_operand.hbm [shape: f32[4,128], index: 4, kind: input, shape index: {}]
  %s5 = inlined_call_operand.vmem [shape: f32[3,256], index: 5, kind: input, shape index: {}]
  %s6 = inlined_call_operand.hbm [shape: f32[8,128], index: 6, kind: output, shape index: {}]
  %s7 = sld [smem:[#allocation0]]
  $region54: #{tpu_custom_call.1} parent=0
    _
  %s9 = ssub.s32 1, %s7
  %s10 = scalar_select 0, %s9, %s7
  $region1: #{tpu_custom_call.1} parent=0
    #allocation2 [shape = 'u8[4096]{0}', space=vmem, size = 0x1000, scoped, tag = 'input window, operand 0, single buffered']
    #allocation3 [shape = 's32[1]{0}', space=sflag, size = 0x4, scoped, tag = 'scoped memory for tpu_custom_call.1']
    #allocation4 [shape = 's32[1]{0}', space=sflag, size = 0x4, scoped, tag = 'scoped memory for tpu_custom_call.1']
    #allocation5 [shape = 'u8[2048]{0}', space=vmem, size = 0x800, scoped, tag = 'input window, operand 1, single buffered']
    #allocation6 [shape = 's32[1]{0}', space=sflag, size = 0x4, scoped, tag = 'scoped memory for tpu_custom_call.1']
    #allocation7 [shape = 'u8[65536]{0}', space=vmem, size = 0x10000, scoped, tag = 'input window, operand 2, single buffered']
    #allocation8 [shape = 'u8[65536]{0}', space=vmem, size = 0x10000, scoped, tag = 'input window, operand 3, single buffered']
    #allocation9 [shape = 's32[1]{0}', space=sflag, size = 0x4, scoped, tag = 'scoped memory for tpu_custom_call.1']
    #allocation10 [shape = 'u8[2048]{0}', space=vmem, size = 0x800, scoped, tag = 'input window, operand 4, single buffered']
    #allocation11 [shape = 'u8[4096]{0}', space=vmem, size = 0x1000, scoped, tag = 'output window, operand 0, single buffered']
    %11 = vsyncpa [#allocation3], 0
    %12 = vsyncpa [#allocation6], 0
    %13 = vsyncpa [#allocation9], 0
    %14 = vsyncpa [#allocation4], 0
    // Predicated region
    $region2: #{tpu_custom_call.1} parent=1 // pred_check
      _
    $region3: #{tpu_custom_call.1} parent=1 // pred_check_branch
      %16 = sbr.rel (0) target = $region5
    $region4: #{tpu_custom_call.1} parent=1 // pred_region
      %s18 = ssub.s32 128, 128
      %19 = vsyncadd [#allocation3], %s18
      %s21 = sshll.u32 [#allocation2], 4
      %s22 = int_to_ptr.vmem [resolvable:$true] %s21
      %24 = dma.hbm_to_vmem [thread:$0]  %s0, 128, %s22, [#allocation3]
    $region5: #{tpu_custom_call.1} parent=1 // pred_fallthru
      _
    // Predicated region
    $region6: #{tpu_custom_call.1} parent=1 // pred_check
      _
    $region7: #{tpu_custom_call.1} parent=1 // pred_check_branch
      %26 = sbr.rel (0) target = $region9
    $region8: #{tpu_custom_call.1} parent=1 // pred_region
      %s28 = ssub.s32 64, 64
      %29 = vsyncadd [#allocation6], %s28
      %s31 = sshll.u32 [#allocation5], 4
      %s32 = int_to_ptr.vmem [resolvable:$true] %s31
      %34 = dma.hbm_to_vmem [thread:$0]  %s1, 64, %s32, [#allocation6]
    $region9: #{tpu_custom_call.1} parent=1 // pred_fallthru
      _
    // Predicated region
    $region10: #{tpu_custom_call.1} parent=1 // pred_check
      _
    $region11: #{tpu_custom_call.1} parent=1 // pred_check_branch
      %36 = sbr.rel (0) target = $region13
    $region12: #{tpu_custom_call.1} parent=1 // pred_region
      %s38 = ssub.s32 2048, 2048
      %39 = vsyncadd [#allocation6], %s38
      %s40 = sshll.u32 [#allocation7], 4
      %s41 = int_to_ptr.vmem [resolvable:$true] %s40
      %46 = dma.hbm_to_vmem [thread:$0]  %s2, 2048, %s41, [#allocation6], 128, 128, 8
    $region13: #{tpu_custom_call.1} parent=1 // pred_fallthru
      _
    // Predicated region
    $region14: #{tpu_custom_call.1} parent=1 // pred_check
      _
    $region15: #{tpu_custom_call.1} parent=1 // pred_check_branch
      %48 = sbr.rel (0) target = $region17
    $region16: #{tpu_custom_call.1} parent=1 // pred_region
      %s50 = ssub.s32 2048, 2048
      %51 = vsyncadd [#allocation9], %s50
      %s52 = sshll.u32 [#allocation8], 4
      %s53 = int_to_ptr.vmem [resolvable:$true] %s52
      %58 = dma.hbm_to_vmem [thread:$0]  %s3, 2048, %s53, [#allocation9], 64, 64, 4
    $region17: #{tpu_custom_call.1} parent=1 // pred_fallthru
      _
    // Predicated region
    $region18: #{tpu_custom_call.1} parent=1 // pred_check
      _
    $region19: #{tpu_custom_call.1} parent=1 // pred_check_branch
      %60 = sbr.rel (0) target = $region21
    $region20: #{tpu_custom_call.1} parent=1 // pred_region
      %s62 = ssub.s32 64, 64
      %63 = vsyncadd [#allocation9], %s62
      %s65 = sshll.u32 [#allocation10], 4
      %s66 = int_to_ptr.vmem [resolvable:$true] %s65
      %68 = dma.hbm_to_vmem [thread:$0]  %s4, 64, %s66, [#allocation9]
    $region21: #{tpu_custom_call.1} parent=1 // pred_fallthru
      _
    // Predicated region
    $region22: #{tpu_custom_call.1} parent=1 // pred_check
      _
    $region23: #{tpu_custom_call.1} parent=1 // pred_check_branch
      %70 = sbr.rel (0) target = $region25
    $region24: #{tpu_custom_call.1} parent=1 // pred_region
      _
    $region25: #{tpu_custom_call.1} parent=1 // pred_fallthru
      _
    // Predicated region
    $region26: #{tpu_custom_call.1} parent=1 // pred_check
      _
    $region27: #{tpu_custom_call.1} parent=1 // pred_check_branch
      %72 = sbr.rel (0) target = $region29
    $region28: #{tpu_custom_call.1} parent=1 // pred_region
      %73 = dma.done [#allocation3], 128
    $region29: #{tpu_custom_call.1} parent=1 // pred_fallthru
      _
    // Predicated region
    $region30: #{tpu_custom_call.1} parent=1 // pred_check
      _
    $region31: #{tpu_custom_call.1} parent=1 // pred_check_branch
      %75 = sbr.rel (0) target = $region33
    $region32: #{tpu_custom_call.1} parent=1 // pred_region
      %76 = dma.done [#allocation6], 64
    $region33: #{tpu_custom_call.1} parent=1 // pred_fallthru
      _
    // Predicated region
    $region34: #{tpu_custom_call.1} parent=1 // pred_check
      _
    $region35: #{tpu_custom_call.1} parent=1 // pred_check_branch
      %78 = sbr.rel (0) target = $region37
    $region36: #{tpu_custom_call.1} parent=1 // pred_region
      %79 = dma.done [#allocation6], 2048
    $region37: #{tpu_custom_call.1} parent=1 // pred_fallthru
      _
    // Predicated region
    $region38: #{tpu_custom_call.1} parent=1 // pred_check
      _
    $region39: #{tpu_custom_call.1} parent=1 // pred_check_branch
      %81 = sbr.rel (0) target = $region41
    $region40: #{tpu_custom_call.1} parent=1 // pred_region
      %82 = dma.done [#allocation9], 2048
    $region41: #{tpu_custom_call.1} parent=1 // pred_fallthru
      _
    // Predicated region
    $region42: #{tpu_custom_call.1} parent=1 // pred_check
      _
    $region43: #{tpu_custom_call.1} parent=1 // pred_check_branch
      %84 = sbr.rel (0) target = $region45
    $region44: #{tpu_custom_call.1} parent=1 // pred_region
      %85 = dma.done [#allocation9], 64
    $region45: #{tpu_custom_call.1} parent=1 // pred_fallthru
      _
    %v87 = vld [vmem:[#allocation2] sm:$0xff]
    %v88 = vld [vmem:[#allocation10] sm:$0xf]
    %v89 = vld [vmem:[%s5] sm:$0x77]
    %v90 = vpack.c.bf16 %v87, %v87
    %v91 = vld [vmem:[#allocation5] sm:$0xf]
    %v92 = vlaneseq
    %v93 = vshrl.u32 %v92, 7
    %v94 = vsub.s32 0, %v93
    %v95 = vrot.slane %v88, %v94
    %vm96 = vcmask 64512
    %v98 = vsel %vm96, %v90, 0
    %vm100 = vcmask 1043456
    %v102 = vsel %vm100, %v91, 0
    %104 = vmatprep.subr.bf16.mxu0 0
    %105 = vmatpush1.bf16.msra.mxu0 0
    %106 = vmatprep.subr.bf16.mxu0 0
    %107 = vmatpush1.bf16.msra.mxu0 0
    %108 = vmatprep.subr.bf16.mxu0 0
    %109 = vmatpush1.bf16.msra.mxu0 0
    %110 = vmatprep.subr.bf16.mxu0 0
    %111 = vmatpush1.bf16.msra.mxu0 0
    %112 = vmatprep.subr.bf16.mxu0 0
    %113 = vmatpush1.bf16.msra.mxu0 0
    %114 = vmatprep.subr.bf16.mxu0 0
    %115 = vmatpush1.bf16.msra.mxu0 0
    %116 = vmatprep.subr.bf16.mxu0 0
    %117 = vmatpush1.bf16.msra.mxu0 0
    %118 = vmatprep.subr.bf16.mxu0 0
    %119 = vmatpush1.bf16.msra.mxu0 %v102
    %120 = vmatprep.subr.bf16.mxu0 0
    %121 = vmatpush2.bf16.msra.mxu0 0
    %122 = vmatprep.subr.bf16.mxu0 0
    %123 = vmatpush2.bf16.msra.mxu0 0
    %124 = vmatprep.subr.bf16.mxu0 0
    %125 = vmatpush2.bf16.msra.mxu0 0
    %126 = vmatprep.subr.bf16.mxu0 0
    %127 = vmatpush2.bf16.msra.mxu0 0
    %128 = vmatprep.subr.bf16.mxu0 0
    %129 = vmatpush2.bf16.msra.mxu0 0
    %130 = vmatprep.subr.bf16.mxu0 0
    %131 = vmatpush2.bf16.msra.mxu0 0
    %132 = vmatprep.subr.bf16.mxu0 0
    %133 = vmatpush2.bf16.msra.mxu0 0
    %134 = vmatprep.subr.bf16.mxu0 0
    %135 = vmatpush2.bf16.msra.mxu0 0
    %136 = vmatprep.mubr.bf16.mxu0 0
    %137 = vmatmul.mubr.bf16.gmra.mxu0 %v98
    %v138 = vpop.f32.mrf.mxu0
    %v139 = vadd.f32 %v95, %v138
    %v140 = vpop.f32.mrf.mxu0
    %v141 = vpop.f32.mrf.mxu0
    %v142 = vpop.f32.mrf.mxu0
    %143 = vdwg.mxu0
    %v144 = vrot.slane %v139, 4
    %v145 = vadd.f32 %v139, %v144
    %v146 = vrot.slane %v145, 2
    %v147 = vadd.f32 %v145, %v146
    %v148 = vrot.slane %v147, 1
    %v149 = vadd.f32 %v147, %v148
    %v150 = vmul.f32 %v149, 0.125
    %v151 = vmul.f32 %v139, %v139
    %v152 = vrot.slane %v151, 4
    %v153 = vadd.f32 %v151, %v152
    %v154 = vrot.slane %v153, 2
    %v155 = vadd.f32 %v153, %v154
    %v156 = vrot.slane %v155, 1
    %v157 = vadd.f32 %v155, %v156
    %v158 = vmul.f32 %v157, 0.125
    %v159 = vmul.f32 %v150, %v150
    %v160 = vsub.f32 %v158, %v159
    %v161 = vadd.f32 %v160, 1e-05
    %v162 = vrsqrt.pop %v161
    %v163 = vmul.f32 %v88, %v162
    %v164 = vmul.f32 %v150, %v163
    %v166 = vrot.slane %v164, 7
    %v168 = vsub.f32 %v88, %v166
    %v169 = vlaneseq
    %v170 = vshrl.u32 %v169, 7
    %v171 = vsub.s32 1, %v170
    %v172 = vrot.slane %v163, %v171
    %v173 = vmul.f32 %v139, %v172
    %v174 = vlaneseq
    %v175 = vshrl.u32 %v174, 7
    %v176 = vsub.s32 2, %v175
    %v177 = vrot.slane %v168, %v176
    %v178 = vadd.f32 %v173, %v177
    %v179 = vpack.c.bf16 %v178, %v178
    %v180 = vld [vmem:[#allocation7] sm:$0xff]
    %v181 = vld [vmem:[#allocation7 + $0x8] sm:$0xff]
    %v182 = vld [vmem:[#allocation7 + $0x10] sm:$0xff]
    %v183 = vld [vmem:[#allocation7 + $0x18] sm:$0xff]
    %v184 = vld [vmem:[#allocation7 + $0x20] sm:$0xff]
    %v185 = vld [vmem:[#allocation7 + $0x28] sm:$0xff]
    %v186 = vld [vmem:[#allocation7 + $0x30] sm:$0xff]
    %v187 = vld [vmem:[#allocation7 + $0x38] sm:$0xff]
    %v188 = vld [vmem:[#allocation7 + $0x40] sm:$0xff]
    %v189 = vld [vmem:[#allocation7 + $0x48] sm:$0xff]
    %v190 = vld [vmem:[#allocation7 + $0x50] sm:$0xff]
    %v191 = vld [vmem:[#allocation7 + $0x58] sm:$0xff]
    %v192 = vld [vmem:[#allocation7 + $0x60] sm:$0xff]
    %v193 = vld [vmem:[#allocation7 + $0x68] sm:$0xff]
    %v194 = vld [vmem:[#allocation7 + $0x70] sm:$0xff]
    %v195 = vld [vmem:[#allocation7 + $0x78] sm:$0xff]
    %v197 = vlaneseq
    %v198 = vshrl.u32 %v197, 7
    %v199 = vsub.s32 0, %v198
    %v200 = vrot.slane %v89, %v199
    %v201 = vlaneseq
    %v202 = vshrl.u32 %v201, 7
    %v203 = vsub.s32 4, %v202
    %v204 = vrot.slane %v89, %v203
    %v207 = vlaneseq
    %v208 = vshrl.u32 %v207, 7
    %v209 = vsub.s32 0, %v208
    %v210 = vrot.slane %v200, %v209
    %v211 = vlaneseq
    %v212 = vshrl.u32 %v211, 7
    %v213 = vsub.s32 0, %v212
    %v214 = vrot.slane %v204, %v213
    %v231 = vunpack.c.l.b16 %v180
    %v232 = vunpack.c.h.b16 %v180
    %v233 = vunpack.c.l.b16 %v181
    %v234 = vunpack.c.h.b16 %v181
    %v235 = vunpack.c.l.b16 %v182
    %v236 = vunpack.c.h.b16 %v182
    %v237 = vunpack.c.l.b16 %v183
    %v238 = vunpack.c.h.b16 %v183
    %v239 = vunpack.c.l.b16 %v184
    %v240 = vunpack.c.h.b16 %v184
    %v241 = vunpack.c.l.b16 %v185
    %v242 = vunpack.c.h.b16 %v185
    %v243 = vunpack.c.l.b16 %v186
    %v244 = vunpack.c.h.b16 %v186
    %v245 = vunpack.c.l.b16 %v187
    %v246 = vunpack.c.h.b16 %v187
    %v247 = vunpack.c.l.b16 %v188
    %v248 = vunpack.c.h.b16 %v188
    %v249 = vunpack.c.l.b16 %v189
    %v250 = vunpack.c.h.b16 %v189
    %v251 = vunpack.c.l.b16 %v190
    %v252 = vunpack.c.h.b16 %v190
    %v253 = vunpack.c.l.b16 %v191
    %v254 = vunpack.c.h.b16 %v191
    %v255 = vunpack.c.l.b16 %v192
    %v256 = vunpack.c.h.b16 %v192
    %v257 = vunpack.c.l.b16 %v193
    %v258 = vunpack.c.h.b16 %v193
    %v259 = vunpack.c.l.b16 %v194
    %v260 = vunpack.c.h.b16 %v194
    %v261 = vunpack.c.l.b16 %v195
    %v262 = vunpack.c.h.b16 %v195
    %v263 = vpack.c.b16 %v233, %v231
    %v264 = vpack.c.b16 %v234, %v232
    %v265 = vpack.c.b16 %v237, %v235
    %v266 = vpack.c.b16 %v238, %v236
    %v267 = vpack.c.b16 %v241, %v239
    %v268 = vpack.c.b16 %v242, %v240
    %v269 = vpack.c.b16 %v245, %v243
    %v270 = vpack.c.b16 %v246, %v244
    %v271 = vpack.c.b16 %v249, %v247
    %v272 = vpack.c.b16 %v250, %v248
    %v273 = vpack.c.b16 %v253, %v251
    %v274 = vpack.c.b16 %v254, %v252
    %v275 = vpack.c.b16 %v257, %v255
    %v276 = vpack.c.b16 %v258, %v256
    %v277 = vpack.c.b16 %v261, %v259
    %v278 = vpack.c.b16 %v262, %v260
    %295 = vmatprep.subr.bf16.mxu0 %v278
    %296 = vmatpush1.bf16.msra.mxu0 %v277
    %297 = vmatprep.subr.bf16.mxu0 %v276
    %298 = vmatpush1.bf16.msra.mxu0 %v275
    %299 = vmatprep.subr.bf16.mxu0 %v274
    %300 = vmatpush1.bf16.msra.mxu0 %v273
    %301 = vmatprep.subr.bf16.mxu0 %v272
    %302 = vmatpush1.bf16.msra.mxu0 %v271
    %303 = vmatprep.subr.bf16.mxu0 %v270
    %304 = vmatpush1.bf16.msra.mxu0 %v269
    %305 = vmatprep.subr.bf16.mxu0 %v268
    %306 = vmatpush1.bf16.msra.mxu0 %v267
    %307 = vmatprep.subr.bf16.mxu0 %v266
    %308 = vmatpush1.bf16.msra.mxu0 %v265
    %309 = vmatprep.subr.bf16.mxu0 %v264
    %310 = vmatpush1.bf16.msra.mxu0 %v263
    %311 = vmatprep.subr.bf16.mxu0 0
    %312 = vmatpush2.bf16.msra.mxu0 0
    %313 = vmatprep.subr.bf16.mxu0 0
    %314 = vmatpush2.bf16.msra.mxu0 0
    %315 = vmatprep.subr.bf16.mxu0 0
    %316 = vmatpush2.bf16.msra.mxu0 0
    %317 = vmatprep.subr.bf16.mxu0 0
    %318 = vmatpush2.bf16.msra.mxu0 0
    %319 = vmatprep.subr.bf16.mxu0 0
    %320 = vmatpush2.bf16.msra.mxu0 0
    %321 = vmatprep.subr.bf16.mxu0 0
    %322 = vmatpush2.bf16.msra.mxu0 0
    %323 = vmatprep.subr.bf16.mxu0 0
    %324 = vmatpush2.bf16.msra.mxu0 0
    %325 = vmatprep.subr.bf16.mxu0 0
    %326 = vmatpush2.bf16.msra.mxu0 0
    %327 = vmatprep.mubr.bf16.mxu0 0
    %328 = vmatmul.mubr.bf16.gmra.mxu0 %v179
    %v329 = vpop.f32.mrf.mxu0
    %v330 = vadd.f32 %v210, %v329
    %v331 = vpop.f32.mrf.mxu0
    %v332 = vadd.f32 %v214, %v331
    %v333 = vpop.f32.mrf.mxu0
    %v334 = vpop.f32.mrf.mxu0
    %335 = vdwg.mxu0
    %v336 = vrot.slane %v330, 4
    %v337 = vadd.f32 %v330, %v336
    %v338 = vrot.slane %v337, 2
    %v339 = vadd.f32 %v337, %v338
    %v340 = vrot.slane %v339, 1
    %v341 = vadd.f32 %v339, %v340
    %v342 = vrot.slane %v332, 4
    %v343 = vadd.f32 %v332, %v342
    %v344 = vrot.slane %v343, 2
    %v345 = vadd.f32 %v343, %v344
    %v346 = vrot.slane %v345, 1
    %v347 = vadd.f32 %v345, %v346
    %v348 = vmul.f32 %v341, 0.125
    %v349 = vmul.f32 %v347, 0.125
    %v350 = vmul.f32 %v330, %v330
    %v351 = vmul.f32 %v332, %v332
    %v352 = vrot.slane %v350, 4
    %v353 = vadd.f32 %v350, %v352
    %v354 = vrot.slane %v353, 2
    %v355 = vadd.f32 %v353, %v354
    %v356 = vrot.slane %v355, 1
    %v357 = vadd.f32 %v355, %v356
    %v358 = vrot.slane %v351, 4
    %v359 = vadd.f32 %v351, %v358
    %v360 = vrot.slane %v359, 2
    %v361 = vadd.f32 %v359, %v360
    %v362 = vrot.slane %v361, 1
    %v363 = vadd.f32 %v361, %v362
    %v364 = vmul.f32 %v357, 0.125
    %v365 = vmul.f32 %v363, 0.125
    %v366 = vmul.f32 %v348, %v348
    %v367 = vmul.f32 %v349, %v349
    %v368 = vsub.f32 %v364, %v366
    %v369 = vsub.f32 %v365, %v367
    %v370 = vadd.f32 %v368, 1e-05
    %v371 = vadd.f32 %v369, 1e-05
    %v372 = vrsqrt.pop %v370
    %v373 = vrsqrt.pop %v371
    %v376 = vcombine.low %v372, %v373
    %v377 = vrot.slane %v376, 7
    %v379 = vmul.f32 %v89, %v377
    %v381 = vlaneseq
    %v382 = vshrl.u32 %v381, 7
    %v383 = vsub.s32 1, %v382
    %v384 = vrot.slane %v379, %v383
    %v385 = vlaneseq
    %v386 = vshrl.u32 %v385, 7
    %v387 = vsub.s32 5, %v386
    %v388 = vrot.slane %v379, %v387
    %v391 = vmul.f32 %v348, %v384
    %v392 = vmul.f32 %v349, %v388
    %v395 = vcombine.low %v391, %v392
    %v396 = vrot.slane %v395, 6
    %v398 = vsub.f32 %v89, %v396
    %v399 = vlaneseq
    %v400 = vshrl.u32 %v399, 7
    %v401 = vsub.s32 1, %v400
    %v402 = vrot.slane %v384, %v401
    %v403 = vlaneseq
    %v404 = vshrl.u32 %v403, 7
    %v405 = vsub.s32 1, %v404
    %v406 = vrot.slane %v388, %v405
    %v407 = vmul.f32 %v330, %v402
    %v408 = vmul.f32 %v332, %v406
    %v410 = vlaneseq
    %v411 = vshrl.u32 %v410, 7
    %v412 = vsub.s32 2, %v411
    %v413 = vrot.slane %v398, %v412
    %v414 = vlaneseq
    %v415 = vshrl.u32 %v414, 7
    %v416 = vsub.s32 6, %v415
    %v417 = vrot.slane %v398, %v416
    %v420 = vlaneseq
    %v421 = vshrl.u32 %v420, 7
    %v422 = vsub.s32 2, %v421
    %v423 = vrot.slane %v413, %v422
    %v424 = vlaneseq
    %v425 = vshrl.u32 %v424, 7
    %v426 = vsub.s32 2, %v425
    %v427 = vrot.slane %v417, %v426
    %v428 = vadd.f32 %v407, %v423
    %v429 = vadd.f32 %v408, %v427
    %v430 = vpack.c.bf16 %v428, %v428
    %v431 = vpack.c.bf16 %v429, %v429
    %v432 = vld [vmem:[#allocation8] sm:$0xf]
    %v433 = vld [vmem:[#allocation8 + $0x4] sm:$0xf]
    %v434 = vld [vmem:[#allocation8 + $0x8] sm:$0xf]
    %v435 = vld [vmem:[#allocation8 + $0xc] sm:$0xf]
    %v436 = vld [vmem:[#allocation8 + $0x10] sm:$0xf]
    %v437 = vld [vmem:[#allocation8 + $0x14] sm:$0xf]
    %v438 = vld [vmem:[#allocation8 + $0x18] sm:$0xf]
    %v439 = vld [vmem:[#allocation8 + $0x1c] sm:$0xf]
    %v440 = vld [vmem:[#allocation8 + $0x20] sm:$0xf]
    %v441 = vld [vmem:[#allocation8 + $0x24] sm:$0xf]
    %v442 = vld [vmem:[#allocation8 + $0x28] sm:$0xf]
    %v443 = vld [vmem:[#allocation8 + $0x2c] sm:$0xf]
    %v444 = vld [vmem:[#allocation8 + $0x30] sm:$0xf]
    %v445 = vld [vmem:[#allocation8 + $0x34] sm:$0xf]
    %v446 = vld [vmem:[#allocation8 + $0x38] sm:$0xf]
    %v447 = vld [vmem:[#allocation8 + $0x3c] sm:$0xf]
    %v448 = vld [vmem:[#allocation8 + $0x40] sm:$0xf]
    %v449 = vld [vmem:[#allocation8 + $0x44] sm:$0xf]
    %v450 = vld [vmem:[#allocation8 + $0x48] sm:$0xf]
    %v451 = vld [vmem:[#allocation8 + $0x4c] sm:$0xf]
    %v452 = vld [vmem:[#allocation8 + $0x50] sm:$0xf]
    %v453 = vld [vmem:[#allocation8 + $0x54] sm:$0xf]
    %v454 = vld [vmem:[#allocation8 + $0x58] sm:$0xf]
    %v455 = vld [vmem:[#allocation8 + $0x5c] sm:$0xf]
    %v456 = vld [vmem:[#allocation8 + $0x60] sm:$0xf]
    %v457 = vld [vmem:[#allocation8 + $0x64] sm:$0xf]
    %v458 = vld [vmem:[#allocation8 + $0x68] sm:$0xf]
    %v459 = vld [vmem:[#allocation8 + $0x6c] sm:$0xf]
    %v460 = vld [vmem:[#allocation8 + $0x70] sm:$0xf]
    %v461 = vld [vmem:[#allocation8 + $0x74] sm:$0xf]
    %v462 = vld [vmem:[#allocation8 + $0x78] sm:$0xf]
    %v463 = vld [vmem:[#allocation8 + $0x7c] sm:$0xf]
    %v464 = vlaneseq
    %v465 = vshrl.u32 %v464, 7
    %v466 = vsub.s32 3, %v465
    %v467 = vrot.slane %v88, %v466
    %v500 = vunpack.c.l.b16 %v432
    %v501 = vunpack.c.l.b16 %v433
    %v502 = vunpack.c.l.b16 %v434
    %v503 = vunpack.c.l.b16 %v435
    %v504 = vunpack.c.l.b16 %v436
    %v505 = vunpack.c.l.b16 %v437
    %v506 = vunpack.c.l.b16 %v438
    %v507 = vunpack.c.l.b16 %v439
    %v508 = vunpack.c.l.b16 %v440
    %v509 = vunpack.c.l.b16 %v441
    %v510 = vunpack.c.l.b16 %v442
    %v511 = vunpack.c.l.b16 %v443
    %v512 = vunpack.c.l.b16 %v444
    %v513 = vunpack.c.l.b16 %v445
    %v514 = vunpack.c.l.b16 %v446
    %v515 = vunpack.c.l.b16 %v447
    %v516 = vunpack.c.l.b16 %v448
    %v517 = vunpack.c.l.b16 %v449
    %v518 = vunpack.c.l.b16 %v450
    %v519 = vunpack.c.l.b16 %v451
    %v520 = vunpack.c.l.b16 %v452
    %v521 = vunpack.c.l.b16 %v453
    %v522 = vunpack.c.l.b16 %v454
    %v523 = vunpack.c.l.b16 %v455
    %v524 = vunpack.c.l.b16 %v456
    %v525 = vunpack.c.l.b16 %v457
    %v526 = vunpack.c.l.b16 %v458
    %v527 = vunpack.c.l.b16 %v459
    %v528 = vunpack.c.l.b16 %v460
    %v529 = vunpack.c.l.b16 %v461
    %v530 = vunpack.c.l.b16 %v462
    %v531 = vunpack.c.l.b16 %v463
    %v532 = vpack.c.b16 %v501, %v500
    %v533 = vpack.c.b16 %v503, %v502
    %v534 = vpack.c.b16 %v505, %v504
    %v535 = vpack.c.b16 %v507, %v506
    %v536 = vpack.c.b16 %v509, %v508
    %v537 = vpack.c.b16 %v511, %v510
    %v538 = vpack.c.b16 %v513, %v512
    %v539 = vpack.c.b16 %v515, %v514
    %v540 = vpack.c.b16 %v517, %v516
    %v541 = vpack.c.b16 %v519, %v518
    %v542 = vpack.c.b16 %v521, %v520
    %v543 = vpack.c.b16 %v523, %v522
    %v544 = vpack.c.b16 %v525, %v524
    %v545 = vpack.c.b16 %v527, %v526
    %v546 = vpack.c.b16 %v529, %v528
    %v547 = vpack.c.b16 %v531, %v530
    %564 = vmatprep.subr.bf16.mxu0 0
    %565 = vmatpush1.bf16.msra.mxu0 %v539
    %566 = vmatprep.subr.bf16.mxu0 0
    %567 = vmatpush1.bf16.msra.mxu0 %v538
    %568 = vmatprep.subr.bf16.mxu0 0
    %569 = vmatpush1.bf16.msra.mxu0 %v537
    %570 = vmatprep.subr.bf16.mxu0 0
    %571 = vmatpush1.bf16.msra.mxu0 %v536
    %572 = vmatprep.subr.bf16.mxu0 0
    %573 = vmatpush1.bf16.msra.mxu0 %v535
    %574 = vmatprep.subr.bf16.mxu0 0
    %575 = vmatpush1.bf16.msra.mxu0 %v534
    %576 = vmatprep.subr.bf16.mxu0 0
    %577 = vmatpush1.bf16.msra.mxu0 %v533
    %578 = vmatprep.subr.bf16.mxu0 0
    %579 = vmatpush1.bf16.msra.mxu0 %v532
    %580 = vmatprep.subr.bf16.mxu0 0
    %581 = vmatpush2.bf16.msra.mxu0 %v547
    %582 = vmatprep.subr.bf16.mxu0 0
    %583 = vmatpush2.bf16.msra.mxu0 %v546
    %584 = vmatprep.subr.bf16.mxu0 0
    %585 = vmatpush2.bf16.msra.mxu0 %v545
    %586 = vmatprep.subr.bf16.mxu0 0
    %587 = vmatpush2.bf16.msra.mxu0 %v544
    %588 = vmatprep.subr.bf16.mxu0 0
    %589 = vmatpush2.bf16.msra.mxu0 %v543
    %590 = vmatprep.subr.bf16.mxu0 0
    %591 = vmatpush2.bf16.msra.mxu0 %v542
    %592 = vmatprep.subr.bf16.mxu0 0
    %593 = vmatpush2.bf16.msra.mxu0 %v541
    %594 = vmatprep.subr.bf16.mxu0 0
    %595 = vmatpush2.bf16.msra.mxu0 %v540
    %596 = vmatprep.mubr.bf16.mxu0 %v431
    %597 = vmatmul.mubr.bf16.gmra.mxu0 %v430
    %v598 = vpop.f32.mrf.mxu0
    %v599 = vadd.f32 %v467, %v598
    %v600 = vpop.f32.mrf.mxu0
    %v601 = vpop.f32.mrf.mxu0
    %v602 = vpop.f32.mrf.mxu0
    %603 = vdwg.mxu0
    %604 = vst [vmem:[#allocation11] sm:$0xff] %v599
    // Predicated region
    $region46: #{tpu_custom_call.1} parent=1 // pred_check
      _
    $region47: #{tpu_custom_call.1} parent=1 // pred_check_branch
      %606 = sbr.rel (0) target = $region49
    $region48: #{tpu_custom_call.1} parent=1 // pred_region
      %s608 = ssub.s32 128, 128
      %609 = vsyncadd [#allocation4], %s608
      %s611 = sshll.u32 [#allocation11], 4
      %s612 = int_to_ptr.vmem [resolvable:$true] %s611
      %614 = dma.vmem_to_hbm [thread:$0]  %s612, 128, %s6, [#allocation4]
    $region49: #{tpu_custom_call.1} parent=1 // pred_fallthru
      _
    // Predicated region
    $region50: #{tpu_custom_call.1} parent=1 // pred_check
      _
    $region51: #{tpu_custom_call.1} parent=1 // pred_check_branch
      %616 = sbr.rel (0) target = $region53
    $region52: #{tpu_custom_call.1} parent=1 // pred_region
      %617 = dma.done [#allocation4], 128
    $region53: #{tpu_custom_call.1} parent=1 // pred_fallthru
      _
    %618 = vsyncpa [#allocation3], 1
    %619 = vsyncpa [#allocation6], 1
    %620 = vsyncpa [#allocation9], 1
    %621 = vsyncpa [#allocation4], 1

</llo_original>
